<compile_context>
chip_gen: v7x
topology: tpu7x:2x2x1
jax: 0.10.0
libtpu: 0.0.40
codegen_flags: <defaults>
</compile_context>

<pallas_src>
import functools

import numpy as np
import jax
import jax.numpy as jnp
from jax import lax
from jax.experimental import pallas as pl
from jax.experimental.pallas import tpu as pltpu

EPS = 1e-8
LANES = 128          # lane-dense width of the packed power / STFT tensors
IMAG_OFFSET = 64     # imaginary STFT lanes (and clean-power lanes) start here


def _round_up(x, m):
    return ((x + m - 1) // m) * m


# --------------------------- STFT kernel matrix ------------------------------

def make_stft_kernel(winlen, fft_len):
    """ConvSTFT ('hanning sqrt', complex) kernel matrix, lane-dense layout.

    Columns [0, F)            : real part
    Columns [64, 64+F)        : imaginary part
    All other columns         : zero (free MXU columns, zero contributions)
    """
    n = np.arange(winlen)
    window = np.sqrt(0.5 - 0.5 * np.cos(2.0 * np.pi * n / winlen))   # hanning sqrt
    fourier_basis = np.fft.rfft(np.eye(fft_len))[:winlen]            # (winlen, F)
    f_bins = fourier_basis.shape[1]
    assert f_bins <= IMAG_OFFSET, "lane-dense layout requires F <= 64"
    kmat = np.zeros((winlen, LANES), np.float32)
    kmat[:, :f_bins] = np.real(fourier_basis) * window[:, None]
    kmat[:, IMAG_OFFSET:IMAG_OFFSET + f_bins] = np.imag(fourier_basis) * window[:, None]
    return jnp.asarray(kmat), f_bins


# ------------------------------ Pallas kernel --------------------------------

def fused_stft_kernel(est_ref, clean_ref, kmat_ref, mag_ref, part_ref, acc_ref, *, tf):
    """ConvSTFT + power + projection-SNR partial sums, fused per frame tile.

    est_ref / clean_ref : (1, tf, winlen)  overlapping frame slabs
    kmat_ref            : (winlen, LANES)  VMEM-resident constant
    mag_ref             : (1, tf, LANES)   packed power (est lanes<64, clean >=64)
    part_ref            : (1, 8, LANES)    rows 0..2 = per-lane [ee, ec, cc] sums
    acc_ref             : (8, LANES)       VMEM scratch accumulator
    """
    ti = pl.program_id(1)
    n_tiles = pl.num_programs(1)

    @pl.when(ti == 0)
    def _init():
        acc_ref[...] = jnp.zeros_like(acc_ref)

    # One MXU dot per tile: est and clean stacked along M, K = winlen.
    frames = jnp.concatenate([est_ref[0], clean_ref[0]], axis=0)        # (2*tf, winlen)
    spec = jnp.dot(frames, kmat_ref[...],
                   preferred_element_type=jnp.float32)                  # (2*tf, LANES)
    e = spec[:tf]
    c = spec[tf:]

    e_sq = e * e
    c_sq = c * c

    # Packed power: est power -> lanes [0,64), clean power -> lanes [64,128).
    lane = lax.broadcasted_iota(jnp.int32, (tf, LANES), 1)
    low = lane < IMAG_OFFSET
    direct = jnp.where(low, e_sq, c_sq)      # real^2(est) | imag^2(clean)
    swapped = jnp.where(low, c_sq, e_sq)     # real^2(clean) | imag^2(est)
    mag_ref[...] = (direct + pltpu.roll(swapped, shift=IMAG_OFFSET, axis=1))[None]

    # Projection-SNR per-lane partial sums (zero lanes / zero-padded frames
    # contribute exactly zero, so the sums match the unpadded reference).
    acc_ref[0:1, :] += jnp.sum(e_sq, axis=0, keepdims=True)
    acc_ref[1:2, :] += jnp.sum(e * c, axis=0, keepdims=True)
    acc_ref[2:3, :] += jnp.sum(c_sq, axis=0, keepdims=True)

    @pl.when(ti == n_tiles - 1)
    def _finalize():
        part_ref[...] = acc_ref[...][None]


# --------------------------- wrapper helpers ---------------------------------

def _frame_signal(sig, pad_side, hop, ratio, n_frames, n_frames_pad):
    """Overlapping ConvSTFT frames (B, n_frames_pad, winlen); padded frames are zero."""
    b, t = sig.shape
    winlen = ratio * hop
    valid_len = (n_frames - 1) * hop + winlen            # samples conv1d actually reads
    need = (n_frames_pad + ratio - 1) * hop
    sig_p = jnp.pad(sig, ((0, 0), (pad_side, pad_side)))[:, :valid_len]
    sig_p = jnp.pad(sig_p, ((0, 0), (0, need - valid_len)))
    chunks = [sig_p[:, r * hop:(r + n_frames_pad) * hop].reshape(b, n_frames_pad, hop)
              for r in range(ratio)]
    return jnp.concatenate(chunks, axis=-1)              # (B, n_frames_pad, winlen)


def vad_mask_fn(mix_vad, n_frames_stft, winlen, hop):
    """VAD mask (B, n_frames_stft, 1); plain JAX (tiny reduction + shifted add)."""
    b, t = mix_vad.shape
    ratio = winlen // hop
    frame_num = 1 + (t - winlen) // hop
    n_hops = frame_num + ratio - 1
    h = jnp.sum(mix_vad[:, :n_hops * hop].reshape(b, n_hops, hop), axis=-1)
    fs = h[:, :frame_num]
    for r in range(1, ratio):
        fs = fs + h[:, r:frame_num + r]
    label = jnp.where(fs > 0.0, jnp.float32(1.0), jnp.float32(0.1))
    mask = jnp.pad(label, ((0, 0), (0, n_frames_stft - frame_num)))
    return mask[..., None]


# ---------------------------------- forward ----------------------------------

def apc_snr_forward(est_time_domain, clean, mix_vad, kmat, *, winlen, hop,
                    tile_frames=256):
    assert winlen % hop == 0, "split-hop framing requires winlen % hop == 0"
    ratio = winlen // hop
    b, t = est_time_domain.shape
    pad_side = winlen - hop                               # ConvSTFT both-side padding
    n_frames = (t + 2 * pad_side - winlen) // hop + 1     # ConvSTFT frame count

    tf = _round_up(min(tile_frames, _round_up(n_frames, 8)), 8)
    n_frames_pad = _round_up(n_frames, tf)
    n_tiles = n_frames_pad // tf

    est_frames = _frame_signal(est_time_domain, pad_side, hop, ratio, n_frames, n_frames_pad)
    clean_frames = _frame_signal(clean, pad_side, hop, ratio, n_frames, n_frames_pad)

    mag_packed, parts = pl.pallas_call(
        functools.partial(fused_stft_kernel, tf=tf),
        out_shape=(
            jax.ShapeDtypeStruct((b, n_frames_pad, LANES), jnp.float32),
            jax.ShapeDtypeStruct((b, 8, LANES), jnp.float32),
        ),
        grid=(b, n_tiles),
        in_specs=[
            pl.BlockSpec((1, tf, winlen), lambda bi, ti: (bi, ti, 0)),
            pl.BlockSpec((1, tf, winlen), lambda bi, ti: (bi, ti, 0)),
            pl.BlockSpec((winlen, LANES), lambda bi, ti: (0, 0)),
        ],
        out_specs=(
            pl.BlockSpec((1, tf, LANES), lambda bi, ti: (bi, ti, 0)),
            pl.BlockSpec((1, 8, LANES), lambda bi, ti: (bi, 0, 0)),
        ),
        scratch_shapes=[pltpu.VMEM((8, LANES), jnp.float32)],
        compiler_params=pltpu.CompilerParams(
            dimension_semantics=("parallel", "arbitrary")),
    )(est_frames, clean_frames, kmat)

    # Projection SNR from the three per-batch partial sums (tiny, plain JAX).
    sums = jnp.sum(parts[:, :3, :], axis=-1)              # (B, 3): [ee, ec, cc]
    s1s1, s1s2, s2s2 = sums[:, 0], sums[:, 1], sums[:, 2]
    alpha = s1s2 / (s2s2 + EPS)
    target_norm = alpha * alpha * s2s2
    noise_norm = s1s1 - 2.0 * alpha * s1s2 + alpha * alpha * s2s2
    snr = 10.0 * jnp.log10(target_norm / (noise_norm + EPS) + EPS)
    stft_scaled_snr = -jnp.mean(snr)                      # identity scales (see TODO)

    vad_mask = vad_mask_fn(mix_vad, n_frames, winlen, hop)

    # mag_packed stays lane-dense; downstream PMSQE consumer indexes
    # lanes [0,F) (est power) and [64,64+F) (clean power), frames [0,n_frames).
    return stft_scaled_snr, mag_packed, vad_mask


# ------------------------------------ main -----------------------------------

if __name__ == "__main__":
    # Module hyper-parameters (small, consistent with __init__ signature).
    model_winlen = 32
    model_hop = 16
    mag_bins = 16
    theta = 0.01  # unused: AcousticScaler treated as identity (see TODO above)
    fft_len = mag_bins * 2

    kmat, f_bins = make_stft_kernel(model_winlen, fft_len)   # F = mag_bins + 1 = 17

    key = jax.random.PRNGKey(0)
    k1, k2, k3 = jax.random.split(key, 3)
    B, T = 2, 256
    est_time_domain = jax.random.normal(k1, (B, T), dtype=jnp.float32)
    clean = jax.random.normal(k2, (B, T), dtype=jnp.float32)
    vad_raw = jax.random.uniform(k3, (B, T), dtype=jnp.float32)
    mix_vad = jnp.where(vad_raw > 0.4, vad_raw, 0.0)
    mix_vad = mix_vad.at[:, 128:].set(0.0)   # exercise the 0.1 VAD branch

    forward = jax.jit(functools.partial(apc_snr_forward,
                                        winlen=model_winlen, hop=model_hop))
    outs = forward(est_time_domain, clean, mix_vad, kmat)
    jax.block_until_ready(outs)
    print("KERNEL_OK")
</pallas_src>

<mosaic_0001>
module attributes {stable_mosaic.version = 11 : i64} {
  func.func @fused_stft_kernel(%arg0: i32, %arg1: i32, %arg2: memref<1x24x32xf32, #tpu.memory_space<vmem>>, %arg3: memref<1x24x32xf32, #tpu.memory_space<vmem>>, %arg4: memref<32x128xf32, #tpu.memory_space<vmem>>, %arg5: memref<1x24x128xf32, #tpu.memory_space<vmem>>, %arg6: memref<1x8x128xf32, #tpu.memory_space<vmem>>, %arg7: memref<8x128xf32, #tpu.memory_space<vmem>>) attributes {dimension_semantics = [#tpu.dimension_semantics<parallel>, #tpu.dimension_semantics<arbitrary>], iteration_bounds = array<i64: 2, 1>, scalar_prefetch = 0 : i64, scratch_operands = 1 : i64, tpu.core_type = #tpu.core_type<tc>, window_params = [{transform_indices = @transform_0, window_bounds = array<i64: 1, 24, 32>}, {transform_indices = @transform_1, window_bounds = array<i64: 1, 24, 32>}, {pipeline_mode = #tpu.pipeline_mode<synchronous>, transform_indices = @transform_2, window_bounds = array<i64: 32, 128>}, {transform_indices = @transform_3, window_bounds = array<i64: 1, 24, 128>}, {transform_indices = @transform_4, window_bounds = array<i64: 1, 8, 128>}]} {
    %c0_i32 = arith.constant 0 : i32
    %0 = arith.cmpi eq, %arg1, %c0_i32 : i32
    %1 = arith.extui %0 : i1 to i32
    %c0_i32_0 = arith.constant 0 : i32
    %2 = arith.cmpi ne, %1, %c0_i32_0 : i32
    scf.if %2 {
      %cst_27 = arith.constant 0.000000e+00 : f32
      %42 = vector.broadcast %cst_27 : f32 to vector<8x128xf32>
      %c0_28 = arith.constant 0 : index
      %c0_29 = arith.constant 0 : index
      %43 = vector.load %arg7[%c0_28, %c0_29] : memref<8x128xf32, #tpu.memory_space<vmem>>, vector<8x128xf32>
      tpu.vector_store %arg7[%c0_28, %c0_29], %42 {strides = array<i32>} : memref<8x128xf32, #tpu.memory_space<vmem>>, vector<8x128xf32>,
    } else {
    }
    %c0 = arith.constant 0 : index
    %c0_1 = arith.constant 0 : index
    %c0_2 = arith.constant 0 : index
    %3 = vector.load %arg2[%c0, %c0_1, %c0_2] : memref<1x24x32xf32, #tpu.memory_space<vmem>>, vector<1x24x32xf32>
    %4 = vector.shape_cast %3 : vector<1x24x32xf32> to vector<24x32xf32>
    %c0_3 = arith.constant 0 : index
    %c0_4 = arith.constant 0 : index
    %c0_5 = arith.constant 0 : index
    %5 = vector.load %arg3[%c0_3, %c0_4, %c0_5] : memref<1x24x32xf32, #tpu.memory_space<vmem>>, vector<1x24x32xf32>
    %6 = vector.shape_cast %5 : vector<1x24x32xf32> to vector<24x32xf32>
    %7 = tpu.concatenate %4, %6 in 0 : vector<24x32xf32>, vector<24x32xf32> -> vector<48x32xf32>
    %c0_6 = arith.constant 0 : index
    %c0_7 = arith.constant 0 : index
    %8 = vector.load %arg4[%c0_6, %c0_7] : memref<32x128xf32, #tpu.memory_space<vmem>>, vector<32x128xf32>
    %cst = arith.constant dense<0.000000e+00> : vector<48x128xf32>
    %9 = tpu.matmul %7, %8, %cst {dimension_numbers = #tpu.dot_dimension_numbers<[1], [0], [0], [1], [0, 0, 1, 1], [], []>} : vector<48x32xf32>, vector<32x128xf32>, vector<48x128xf32> -> vector<48x128xf32>
    %10 = vector.extract_strided_slice %9 {offsets = [0, 0], sizes = [24, 128], strides = [1, 1]} : vector<48x128xf32> to vector<24x128xf32>
    %11 = vector.extract_strided_slice %9 {offsets = [24, 0], sizes = [24, 128], strides = [1, 1]} : vector<48x128xf32> to vector<24x128xf32>
    %12 = arith.mulf %10, %10 : vector<24x128xf32>
    %13 = arith.mulf %11, %11 : vector<24x128xf32>
    %14 = tpu.iota {dimensions = array<i32: 1>} : vector<24x128xi32>
    %c64_i32 = arith.constant 64 : i32
    %15 = vector.broadcast %c64_i32 : i32 to vector<24x128xi32>
    %16 = arith.cmpi slt, %14, %15 : vector<24x128xi32>
    %17 = arith.select %16, %12, %13 : vector<24x128xi1>, vector<24x128xf32>
    %18 = arith.select %16, %13, %12 : vector<24x128xi1>, vector<24x128xf32>
    %c64_i32_8 = arith.constant 64 : i32
    %19 = tpu.dynamic_rotate %18 by %c64_i32_8 dim 1 : vector<24x128xf32>, i32 -> vector<24x128xf32>
    %20 = arith.addf %17, %19 : vector<24x128xf32>
    %21 = vector.shape_cast %20 : vector<24x128xf32> to vector<1x24x128xf32>
    %c0_9 = arith.constant 0 : index
    %c0_10 = arith.constant 0 : index
    %c0_11 = arith.constant 0 : index
    %22 = vector.load %arg5[%c0_9, %c0_10, %c0_11] : memref<1x24x128xf32, #tpu.memory_space<vmem>>, vector<1x24x128xf32>
    tpu.vector_store %arg5[%c0_9, %c0_10, %c0_11], %21 {strides = array<i32>} : memref<1x24x128xf32, #tpu.memory_space<vmem>>, vector<1x24x128xf32>,
    %c0_12 = arith.constant 0 : index
    %c0_13 = arith.constant 0 : index
    %23 = vector.load %arg7[%c0_12, %c0_13] : memref<8x128xf32, #tpu.memory_space<vmem>>, vector<1x128xf32>
    %cst_14 = arith.constant dense<0.000000e+00> : vector<128xf32>
    %24 = vector.multi_reduction <add>, %12, %cst_14 [0] : vector<24x128xf32> to vector<128xf32>
    %25 = vector.shape_cast %24 : vector<128xf32> to vector<1x128xf32>
    %26 = arith.addf %23, %25 : vector<1x128xf32>
    %c0_15 = arith.constant 0 : index
    %c0_16 = arith.constant 0 : index
    %27 = vector.load %arg7[%c0_15, %c0_16] : memref<8x128xf32, #tpu.memory_space<vmem>>, vector<1x128xf32>
    tpu.vector_store %arg7[%c0_15, %c0_16], %26 {strides = array<i32>} : memref<8x128xf32, #tpu.memory_space<vmem>>, vector<1x128xf32>,
    %c1 = arith.constant 1 : index
    %c0_17 = arith.constant 0 : index
    %28 = vector.load %arg7[%c1, %c0_17] : memref<8x128xf32, #tpu.memory_space<vmem>>, vector<1x128xf32>
    %29 = arith.mulf %10, %11 : vector<24x128xf32>
    %cst_18 = arith.constant dense<0.000000e+00> : vector<128xf32>
    %30 = vector.multi_reduction <add>, %29, %cst_18 [0] : vector<24x128xf32> to vector<128xf32>
    %31 = vector.shape_cast %30 : vector<128xf32> to vector<1x128xf32>
    %32 = arith.addf %28, %31 : vector<1x128xf32>
    %c1_19 = arith.constant 1 : index
    %c0_20 = arith.constant 0 : index
    %33 = vector.load %arg7[%c1_19, %c0_20] : memref<8x128xf32, #tpu.memory_space<vmem>>, vector<1x128xf32>
    tpu.vector_store %arg7[%c1_19, %c0_20], %32 {strides = array<i32>} : memref<8x128xf32, #tpu.memory_space<vmem>>, vector<1x128xf32>,
    %c2 = arith.constant 2 : index
    %c0_21 = arith.constant 0 : index
    %34 = vector.load %arg7[%c2, %c0_21] : memref<8x128xf32, #tpu.memory_space<vmem>>, vector<1x128xf32>
    %cst_22 = arith.constant dense<0.000000e+00> : vector<128xf32>
    %35 = vector.multi_reduction <add>, %13, %cst_22 [0] : vector<24x128xf32> to vector<128xf32>
    %36 = vector.shape_cast %35 : vector<128xf32> to vector<1x128xf32>
    %37 = arith.addf %34, %36 : vector<1x128xf32>
    %c2_23 = arith.constant 2 : index
    %c0_24 = arith.constant 0 : index
    %38 = vector.load %arg7[%c2_23, %c0_24] : memref<8x128xf32, #tpu.memory_space<vmem>>, vector<1x128xf32>
    tpu.vector_store %arg7[%c2_23, %c0_24], %37 {strides = array<i32>} : memref<8x128xf32, #tpu.memory_space<vmem>>, vector<1x128xf32>,
    %c0_i32_25 = arith.constant 0 : i32
    %39 = arith.cmpi eq, %arg1, %c0_i32_25 : i32
    %40 = arith.extui %39 : i1 to i32
    %c0_i32_26 = arith.constant 0 : i32
    %41 = arith.cmpi ne, %40, %c0_i32_26 : i32
    scf.if %41 {
      %c0_27 = arith.constant 0 : index
      %c0_28 = arith.constant 0 : index
      %42 = vector.load %arg7[%c0_27, %c0_28] : memref<8x128xf32, #tpu.memory_space<vmem>>, vector<8x128xf32>
      %43 = vector.shape_cast %42 : vector<8x128xf32> to vector<1x8x128xf32>
      %c0_29 = arith.constant 0 : index
      %c0_30 = arith.constant 0 : index
      %c0_31 = arith.constant 0 : index
      %44 = vector.load %arg6[%c0_29, %c0_30, %c0_31] : memref<1x8x128xf32, #tpu.memory_space<vmem>>, vector<1x8x128xf32>
      tpu.vector_store %arg6[%c0_29, %c0_30, %c0_31], %43 {strides = array<i32>} : memref<1x8x128xf32, #tpu.memory_space<vmem>>, vector<1x8x128xf32>,
    } else {
    }
    return
  }
  func.func @transform_0(%arg0: i32, %arg1: i32) -> (i32, i32, i32) {
    %c0_i32 = arith.constant 0 : i32
    %c0_i32_0 = arith.constant 0 : i32
    return %arg0, %arg1, %c0_i32 : i32, i32, i32
  }
  func.func @transform_1(%arg0: i32, %arg1: i32) -> (i32, i32, i32) {
    %c0_i32 = arith.constant 0 : i32
    %c0_i32_0 = arith.constant 0 : i32
    return %arg0, %arg1, %c0_i32 : i32, i32, i32
  }
  func.func @transform_2(%arg0: i32, %arg1: i32) -> (i32, i32) {
    %c0_i32 = arith.constant 0 : i32
    %c0_i32_0 = arith.constant 0 : i32
    %c0_i32_1 = arith.constant 0 : i32
    return %c0_i32, %c0_i32_0 : i32, i32
  }
  func.func @transform_3(%arg0: i32, %arg1: i32) -> (i32, i32, i32) {
    %c0_i32 = arith.constant 0 : i32
    %c0_i32_0 = arith.constant 0 : i32
    return %arg0, %arg1, %c0_i32 : i32, i32, i32
  }
  func.func @transform_4(%arg0: i32, %arg1: i32) -> (i32, i32, i32) {
    %c0_i32 = arith.constant 0 : i32
    %c0_i32_0 = arith.constant 0 : i32
    %c0_i32_1 = arith.constant 0 : i32
    return %arg0, %c0_i32, %c0_i32_0 : i32, i32, i32
  }
}

</mosaic_0001>

<llo_original>
// kernel: apc_snr_forward.1
$region0: #{apc_snr_forward.1}
  #allocation0 [shape = 'u32[]', space=smem, size = 0x4, offset = 0x4, fixed_abs, tag = 'smem constant byte address 0x4 - core index']
  #allocation1 [shape = 'u32[144,128]{1,0:T(1,128)}', space=vmem, size = 0x12000, scoped, tag = 'internal scratch']
  #allocation2 [shape = 'f32[8,128]{1,0:T(8,128)}', space=vmem, size = 0x1000, scoped, tag = 'scratch operand']
  %s0 = inlined_call_operand.vmem [shape: f32[2,24,32], index: 0, kind: input, shape index: {}]
  %s1 = inlined_call_operand.vmem [shape: f32[2,24,32], index: 1, kind: input, shape index: {}]
  %s2 = inlined_call_operand.vmem [shape: f32[32,128], index: 2, kind: input, shape index: {}]
  %s3 = inlined_call_operand.hbm [shape: f32[2,24,128], index: 3, kind: output, shape index: {0}]
  %s4 = inlined_call_operand.vmem [shape: f32[2,8,128], index: 4, kind: output, shape index: {1}]
  %5 = xla_tuple %s3, %s4
  %s6 = sld [smem:[#allocation0]]
  $region61: #{apc_snr_forward.1} parent=0
    _
  %s8 = ssub.s32 1, %s6
  %s9 = scalar_select 0, %s8, %s6
  $region1: #{apc_snr_forward.1} parent=0
    #allocation3 [shape = 'u8[24576]{0}', space=vmem, size = 0x6000, scoped, tag = 'output window, operand 0']
    #allocation4 [shape = 's32[2]{0}', space=sflag, size = 0x8, scoped, tag = 'scoped memory for apc_snr_forward.1']
    %10 = vsyncpa [#allocation4], 0
    %s11 = scalar_lea.sflag [#allocation4], 1
    %12 = vsyncpa %s11, 0
    loop: start=0, step=1, limit=4
    $region2: #{apc_snr_forward.1} parent=1 // loop_pre_header
      _
    $region3: #{apc_snr_forward.1} parent=1 // loop_header
      %s14 = sphi 0, %s18
      %p15 = scmp.ge.s32.totalorder %s14, 4
      %s21 = sphi 0, %s33
      %s22 = sphi 0, %s29
      %s23 = sphi 0, %s21
      %s24 = sphi 0, %s22
      %s25 = sphi 0, %s23
      %s26 = sphi 0, %s24
      %s38 = sphi 0, %s40
      %s41 = sphi 0, %s38
      %s42 = sphi 0, %s41
      %s58 = sphi 0, %s42
      %s66 = sphi 0, %s68
      %s69 = sphi 0, %s66
      %s70 = sphi 0, %s69
      %s86 = sphi 0, %s70
      %s90 = sphi 0, %s90
      %s92 = sphi 0, %s90
      %s93 = sphi 0, %s92
      %s107 = sphi 0, %s93
      %s115 = sphi 0, %s117
      %s118 = sphi 0, %s115
      %s119 = sphi 0, %s118
      %s135 = sphi 0, %s119
      %s141 = sphi 0, %s143
      %s144 = sphi 0, %s141
      %s145 = sphi 0, %s144
      %s161 = sphi 0, %s145
    $region4: #{apc_snr_forward.1} parent=1 // loop_header_branch
      %17 = sbr.rel (%p15) target = $region8
    $region5: #{apc_snr_forward.1} parent=1 // loop_body
      %s19 = ssub.s32 %s14, 1
      %s20 = ssub.s32 %s14, 2
      %s27 = sadd.s32 1, %s22
      %p28 = scmp.ge.s32.totalorder %s27, 1
      %s29 = scalar_select %p28, 0, %s27
      %s30 = sadd.s32 1, %s21
      %s31 = scalar_select %p28, %s30, %s21
      %p32 = scmp.ge.s32.totalorder %s31, 2
      %s33 = scalar_select %p32, 0, %s31
      %s34 = ssub.s32 %s21, %s33
      %s35 = ssub.s32 %s22, %s29
      %s36 = sor.u32 %s34, %s35
      %p37 = scmp.eq.s32.totalorder %s36, 0
      %s39 = sadd.s32 %s38, 1
      %s40 = scalar_select %p37, %s38, %s39
      %p43 = pneg %p37
      %p44 = scmp.eq.s32.totalorder %s14, 1
      %p45 = por %p43, %p44
      %p46 = scmp.ne.s32.totalorder %s38, %s41
      %p47 = scmp.eq.s32.totalorder %s14, 0
      %p48 = por %p46, %p47
      %p49 = scmp.ne.s32.totalorder %s38, %s41
      %p50 = scmp.eq.s32.totalorder %s19, 1
      %p51 = por %p49, %p50
      %p52 = scmp.ne.s32.totalorder %s41, %s42
      %p53 = scmp.eq.s32.totalorder %s19, 0
      %p54 = por %p52, %p53
      %p55 = scmp.ne.s32.totalorder %s41, %s42
      %p56 = scmp.eq.s32.totalorder %s20, 1
      %p57 = por %p55, %p56
      %p59 = scmp.ne.s32.totalorder %s42, %s58
      %p60 = scmp.eq.s32.totalorder %s20, 0
      %p61 = por %p59, %p60
      %s62 = ssub.s32 %s21, %s33
      %s63 = ssub.s32 %s22, %s29
      %s64 = sor.u32 %s62, %s63
      %p65 = scmp.eq.s32.totalorder %s64, 0
      %s67 = sadd.s32 %s66, 1
      %s68 = scalar_select %p65, %s66, %s67
      %p71 = pneg %p65
      %p72 = scmp.eq.s32.totalorder %s14, 1
      %p73 = por %p71, %p72
      %p74 = scmp.ne.s32.totalorder %s66, %s69
      %p75 = scmp.eq.s32.totalorder %s14, 0
      %p76 = por %p74, %p75
      %p77 = scmp.ne.s32.totalorder %s66, %s69
      %p78 = scmp.eq.s32.totalorder %s19, 1
      %p79 = por %p77, %p78
      %p80 = scmp.ne.s32.totalorder %s69, %s70
      %p81 = scmp.eq.s32.totalorder %s19, 0
      %p82 = por %p80, %p81
      %p83 = scmp.ne.s32.totalorder %s69, %s70
      %p84 = scmp.eq.s32.totalorder %s20, 1
      %p85 = por %p83, %p84
      %p87 = scmp.ne.s32.totalorder %s70, %s86
      %p88 = scmp.eq.s32.totalorder %s20, 0
      %p89 = por %p87, %p88
      %s91 = sadd.s32 %s90, 1
      %p94 = scmp.eq.s32.totalorder %s14, 1
      %p95 = scmp.ne.s32.totalorder %s90, %s92
      %p96 = scmp.eq.s32.totalorder %s14, 0
      %p97 = por %p95, %p96
      %p98 = scmp.ne.s32.totalorder %s90, %s92
      %p99 = scmp.eq.s32.totalorder %s19, 1
      %p100 = por %p98, %p99
      %p101 = scmp.ne.s32.totalorder %s92, %s93
      %p102 = scmp.eq.s32.totalorder %s19, 0
      %p103 = por %p101, %p102
      %p104 = scmp.ne.s32.totalorder %s92, %s93
      %p105 = scmp.eq.s32.totalorder %s20, 1
      %p106 = por %p104, %p105
      %p108 = scmp.ne.s32.totalorder %s93, %s107
      %p109 = scmp.eq.s32.totalorder %s20, 0
      %p110 = por %p108, %p109
      %s111 = ssub.s32 %s21, %s33
      %s112 = ssub.s32 %s22, %s29
      %s113 = sor.u32 %s111, %s112
      %p114 = scmp.eq.s32.totalorder %s113, 0
      %s116 = sadd.s32 %s115, 1
      %s117 = scalar_select %p114, %s115, %s116
      %p120 = pneg %p114
      %p121 = scmp.eq.s32.totalorder %s14, 1
      %p122 = por %p120, %p121
      %p123 = scmp.ne.s32.totalorder %s115, %s118
      %p124 = scmp.eq.s32.totalorder %s14, 0
      %p125 = por %p123, %p124
      %p126 = scmp.ne.s32.totalorder %s115, %s118
      %p127 = scmp.eq.s32.totalorder %s19, 1
      %p128 = por %p126, %p127
      %p129 = scmp.ne.s32.totalorder %s118, %s119
      %p130 = scmp.eq.s32.totalorder %s19, 0
      %p131 = por %p129, %p130
      %p132 = scmp.ne.s32.totalorder %s118, %s119
      %p133 = scmp.eq.s32.totalorder %s20, 1
      %p134 = por %p132, %p133
      %p136 = scmp.ne.s32.totalorder %s119, %s135
      %p137 = scmp.eq.s32.totalorder %s20, 0
      %p138 = por %p136, %p137
      %s139 = ssub.s32 %s21, %s33
      %p140 = scmp.eq.s32.totalorder %s139, 0
      %s142 = sadd.s32 %s141, 1
      %s143 = scalar_select %p140, %s141, %s142
      %p146 = pneg %p140
      %p147 = scmp.eq.s32.totalorder %s14, 1
      %p148 = por %p146, %p147
      %p149 = scmp.ne.s32.totalorder %s141, %s144
      %p150 = scmp.eq.s32.totalorder %s14, 0
      %p151 = por %p149, %p150
      %p152 = scmp.ne.s32.totalorder %s141, %s144
      %p153 = scmp.eq.s32.totalorder %s19, 1
      %p154 = por %p152, %p153
      %p155 = scmp.ne.s32.totalorder %s144, %s145
      %p156 = scmp.eq.s32.totalorder %s19, 0
      %p157 = por %p155, %p156
      %p158 = scmp.ne.s32.totalorder %s144, %s145
      %p159 = scmp.eq.s32.totalorder %s20, 1
      %p160 = por %p158, %p159
      %p162 = scmp.ne.s32.totalorder %s145, %s161
      %p163 = scmp.eq.s32.totalorder %s20, 0
      %p164 = por %p162, %p163
      %p165 = scmp.le.s32.totalorder 1, %s14
      %p166 = scmp.lt.s32.totalorder %s14, 3
      %p167 = pnand %p165, %p166
      %p168 = pneg %p167
      // Predicated region
      $region9: #{apc_snr_forward.1} parent=5 // pred_check
        _
      $region10: #{apc_snr_forward.1} parent=5 // pred_check_branch
        %170 = sbr.rel (%p167) target = $region12
      $region11: #{apc_snr_forward.1} parent=5 // pred_region
        %s171 = ssub.s32 %s14, 1
        // Predicated region
        $region13: #{apc_snr_forward.1} parent=11 // pred_check
          %p172 = pneg %p103
        $region14: #{apc_snr_forward.1} parent=11 // pred_check_branch
          %174 = sbr.rel (%p172) target = $region16
        $region15: #{apc_snr_forward.1} parent=11 // pred_region
          _
        $region16: #{apc_snr_forward.1} parent=11 // pred_fallthru
          _
      $region12: #{apc_snr_forward.1} parent=5 // pred_fallthru
        _
      %p175 = scmp.lt.s32.totalorder %s14, 2
      // Predicated region
      $region17: #{apc_snr_forward.1} parent=5 // pred_check
        %p176 = pneg %p175
      $region18: #{apc_snr_forward.1} parent=5 // pred_check_branch
        %178 = sbr.rel (%p176) target = $region20
      $region19: #{apc_snr_forward.1} parent=5 // pred_region
        // Predicated region
        $region21: #{apc_snr_forward.1} parent=19 // pred_check
          %p179 = pneg %p48
        $region22: #{apc_snr_forward.1} parent=19 // pred_check_branch
          %181 = sbr.rel (%p179) target = $region24
        $region23: #{apc_snr_forward.1} parent=19 // pred_region
          %s182 = smul.u32 3, %s22
          %p183 = scmp.lt.s32.totalorder %s21, 1
          %s184 = scalar_select %p183, %s21, 1
          %p185 = scmp.lt.s32.totalorder %s182, 2
          %s186 = scalar_select %p185, %s182, 2
          %s187 = smul.addr %s184, 3
          %s188 = sadd.s32 %s186, %s187
          %s189 = smul.addr %s188, 8
          %s190 = scalar_lea.vmem %s0, %s189
          %s191 = smul.u32 3, %s22
        $region24: #{apc_snr_forward.1} parent=19 // pred_fallthru
          _
        // Predicated region
        $region25: #{apc_snr_forward.1} parent=19 // pred_check
          %p192 = pneg %p76
        $region26: #{apc_snr_forward.1} parent=19 // pred_check_branch
          %194 = sbr.rel (%p192) target = $region28
        $region27: #{apc_snr_forward.1} parent=19 // pred_region
          %s195 = smul.u32 3, %s22
          %p196 = scmp.lt.s32.totalorder %s21, 1
          %s197 = scalar_select %p196, %s21, 1
          %p198 = scmp.lt.s32.totalorder %s195, 2
          %s199 = scalar_select %p198, %s195, 2
          %s200 = smul.addr %s197, 3
          %s201 = sadd.s32 %s199, %s200
          %s202 = smul.addr %s201, 8
          %s203 = scalar_lea.vmem %s1, %s202
          %s204 = smul.u32 3, %s22
        $region28: #{apc_snr_forward.1} parent=19 // pred_fallthru
          _
      $region20: #{apc_snr_forward.1} parent=5 // pred_fallthru
        _
      %p205 = scmp.le.s32.totalorder 1, %s14
      %p206 = scmp.lt.s32.totalorder %s14, 3
      %p207 = pnand %p205, %p206
      %p208 = pneg %p207
      // Predicated region
      $region29: #{apc_snr_forward.1} parent=5 // pred_check
        _
      $region30: #{apc_snr_forward.1} parent=5 // pred_check_branch
        %210 = sbr.rel (%p207) target = $region32
      $region31: #{apc_snr_forward.1} parent=5 // pred_region
        %s211 = ssub.s32 %s14, 1
        %s212 = smul.u32 3, %s24
        %p213 = scmp.lt.s32.totalorder %s23, 1
        %s214 = scalar_select %p213, %s23, 1
        %p215 = scmp.lt.s32.totalorder %s212, 2
        %s216 = scalar_select %p215, %s212, 2
        %s217 = smul.addr %s214, 3
        %s218 = sadd.s32 %s216, %s217
        %s219 = smul.addr %s218, 8
        %s220 = scalar_lea.vmem %s0, %s219
        %p221 = pneg %p54
        %p222 = pneg %p51
        %s223 = smul.u32 3, %s24
        %p224 = scmp.lt.s32.totalorder %s23, 1
        %s225 = scalar_select %p224, %s23, 1
        %p226 = scmp.lt.s32.totalorder %s223, 2
        %s227 = scalar_select %p226, %s223, 2
        %s228 = smul.addr %s225, 3
        %s229 = sadd.s32 %s227, %s228
        %s230 = smul.addr %s229, 8
        %s231 = scalar_lea.vmem %s1, %s230
        %p232 = pneg %p82
        %p233 = pneg %p79
        %p234 = pneg %p103
        %p235 = pneg %p100
        %p236 = pneg %p131
        %p237 = pneg %p128
        %s238 = sand.u32 %s118, 1
        %s239 = scalar_lea.sflag [#allocation4], %s238
        %s240 = sand.u32 %s118, 1
        %s241 = smul.addr %s240, 24
        %s242 = scalar_lea.vmem [#allocation3], %s241
        %p243 = pneg %p157
        %p244 = pneg %p154
        %p245 = scmp.lt.s32.totalorder %s23, 1
        %s246 = scalar_select %p245, %s23, 1
        %s247 = smul.addr %s246, 8
        %s248 = scalar_lea.vmem %s4, %s247
        %s249 = smul.u32 3, %s24
        %p250 = scmp.lt.s32.totalorder %s23, 1
        %s251 = scalar_select %p250, %s23, 1
        %p252 = scmp.lt.s32.totalorder %s249, 2
        %s253 = scalar_select %p252, %s249, 2
        %s254 = smul.addr %s251, 3
        %s255 = sadd.s32 %s253, %s254
        %s256 = smul.addr %s255, 8
        %s257 = scalar_lea.vmem %s0, %s256
        %s258 = smul.u32 3, %s24
        %s259 = smul.u32 3, %s24
        %p260 = scmp.lt.s32.totalorder %s23, 1
        %s261 = scalar_select %p260, %s23, 1
        %p262 = scmp.lt.s32.totalorder %s259, 2
        %s263 = scalar_select %p262, %s259, 2
        %s264 = smul.addr %s261, 3
        %s265 = sadd.s32 %s263, %s264
        %s266 = smul.addr %s265, 8
        %s267 = scalar_lea.vmem %s1, %s266
        %s268 = smul.u32 3, %s24
        %s269 = smul.u32 3, %s24
        %p270 = scmp.lt.s32.totalorder %s23, 1
        %s271 = scalar_select %p270, %s23, 1
        %s272 = smul.addr %s271, 8
        %s273 = scalar_lea.vmem %s4, %s272
        %p274 = scmp.eq.s32.totalorder %s24, 0
        // Predicated region
        $region33: #{apc_snr_forward.1} parent=31 // pred_check
          %p275 = pneg %p274
        $region34: #{apc_snr_forward.1} parent=31 // pred_check_branch
          %277 = sbr.rel (%p275) target = $region36
        $region35: #{apc_snr_forward.1} parent=31 // pred_region
          %278 = vst [vmem:[#allocation2] sm:$0xff] 0.0
        $region36: #{apc_snr_forward.1} parent=31 // pred_fallthru
          _
        %v279 = vld [vmem:[%s257] sm:$0xff]
        %v280 = vld [vmem:[%s257 + $0x8] sm:$0xff]
        %v281 = vld [vmem:[%s257 + $0x10] sm:$0xff]
        %v282 = vld [vmem:[%s267] sm:$0xff]
        %v283 = vld [vmem:[%s267 + $0x8] sm:$0xff]
        %v284 = vld [vmem:[%s267 + $0x10] sm:$0xff]
        %v285 = vld [vmem:[%s2] sm:$0xff]
        %v286 = vld [vmem:[%s2 + $0x8] sm:$0xff]
        %v287 = vld [vmem:[%s2 + $0x10] sm:$0xff]
        %v288 = vld [vmem:[%s2 + $0x18] sm:$0xff]
        %vm289 = vcmask 261120
        %v291 = vsel %vm289, %v279, 0
        %v294 = vsel %vm289, %v280, 0
        %v297 = vsel %vm289, %v281, 0
        %v300 = vsel %vm289, %v282, 0
        %v303 = vsel %vm289, %v283, 0
        %v306 = vsel %vm289, %v284, 0
        %308 = vmatprep.subr.mxu0 0.0
        %309 = vmatpush1.msra.mxu0 %v285
        %310 = vmatprep.subr.mxu0 0.0
        %311 = vmatpush1.msra.mxu0 %v286
        %312 = vmatprep.subr.mxu0 0.0
        %313 = vmatpush1.msra.mxu0 %v287
        %314 = vmatprep.subr.mxu0 0.0
        %315 = vmatpush1.msra.mxu0 %v288
        %316 = vmatprep.subr.mxu0 0.0
        %317 = vmatpush1.msra.mxu0 0.0
        %318 = vmatprep.subr.mxu0 0.0
        %319 = vmatpush1.msra.mxu0 0.0
        %320 = vmatprep.subr.mxu0 0.0
        %321 = vmatpush1.msra.mxu0 0.0
        %322 = vmatprep.subr.mxu0 0.0
        %323 = vmatpush1.msra.mxu0 0.0
        %324 = vmatprep.subr.mxu0 0.0
        %325 = vmatpush1.msra.mxu0 0.0
        %326 = vmatprep.subr.mxu0 0.0
        %327 = vmatpush1.msra.mxu0 0.0
        %328 = vmatprep.subr.mxu0 0.0
        %329 = vmatpush1.msra.mxu0 0.0
        %330 = vmatprep.subr.mxu0 0.0
        %331 = vmatpush1.msra.mxu0 0.0
        %332 = vmatprep.subr.mxu0 0.0
        %333 = vmatpush1.msra.mxu0 0.0
        %334 = vmatprep.subr.mxu0 0.0
        %335 = vmatpush1.msra.mxu0 0.0
        %336 = vmatprep.subr.mxu0 0.0
        %337 = vmatpush1.msra.mxu0 0.0
        %338 = vmatprep.subr.mxu0 0.0
        %339 = vmatpush1.msra.mxu0 0.0
        %340 = vmatprep.subr.mxu0 0.0
        %341 = vmatpush1.msra.mxu0 0.0
        %342 = vmatprep.subr.mxu0 0.0
        %343 = vmatpush1.msra.mxu0 0.0
        %344 = vmatprep.subr.mxu0 0.0
        %345 = vmatpush1.msra.mxu0 0.0
        %346 = vmatprep.subr.mxu0 0.0
        %347 = vmatpush1.msra.mxu0 0.0
        %348 = vmatprep.subr.mxu0 0.0
        %349 = vmatpush1.msra.mxu0 0.0
        %350 = vmatprep.subr.mxu0 0.0
        %351 = vmatpush1.msra.mxu0 0.0
        %352 = vmatprep.subr.mxu0 0.0
        %353 = vmatpush1.msra.mxu0 0.0
        %354 = vmatprep.subr.mxu0 0.0
        %355 = vmatpush1.msra.mxu0 0.0
        %356 = vmatprep.subr.mxu0 0.0
        %357 = vmatpush1.msra.mxu0 0.0
        %358 = vmatprep.subr.mxu0 0.0
        %359 = vmatpush1.msra.mxu0 0.0
        %360 = vmatprep.subr.mxu0 0.0
        %361 = vmatpush1.msra.mxu0 0.0
        %362 = vmatprep.subr.mxu0 0.0
        %363 = vmatpush1.msra.mxu0 0.0
        %364 = vmatprep.subr.mxu0 0.0
        %365 = vmatpush1.msra.mxu0 0.0
        %366 = vmatprep.subr.mxu0 0.0
        %367 = vmatpush1.msra.mxu0 0.0
        %368 = vmatprep.subr.mxu0 0.0
        %369 = vmatpush1.msra.mxu0 0.0
        %370 = vmatprep.subr.mxu0 0.0
        %371 = vmatpush1.msra.mxu0 0.0
        %372 = vmatprep.mubr.f32.mxu0 0.0
        %373 = vmatmul.mubr.f32.gmra.mrb[0].mxu0 %v291
        %v374 = vpop.f32.mrb[0].mxu0
        %v375 = vadd.f32 0.0, %v374
        %v376 = vpop.f32.mrb[0].mxu0
        %377 = vmatprep.mubr.f32.mxu0 0.0
        %378 = vmatmul.mubr.f32.gmra.mrb[0].mxu0 %v294
        %v379 = vpop.f32.mrb[0].mxu0
        %v380 = vadd.f32 0.0, %v379
        %v381 = vpop.f32.mrb[0].mxu0
        %382 = vmatprep.mubr.f32.mxu0 0.0
        %383 = vmatmul.mubr.f32.gmra.mrb[0].mxu0 %v297
        %v384 = vpop.f32.mrb[0].mxu0
        %v385 = vadd.f32 0.0, %v384
        %v386 = vpop.f32.mrb[0].mxu0
        %387 = vmatprep.mubr.f32.mxu0 0.0
        %388 = vmatmul.mubr.f32.gmra.mrb[0].mxu0 %v300
        %v389 = vpop.f32.mrb[0].mxu0
        %v390 = vadd.f32 0.0, %v389
        %v391 = vpop.f32.mrb[0].mxu0
        %392 = vmatprep.mubr.f32.mxu0 0.0
        %393 = vmatmul.mubr.f32.gmra.mrb[0].mxu0 %v303
        %v394 = vpop.f32.mrb[0].mxu0
        %v395 = vadd.f32 0.0, %v394
        %v396 = vpop.f32.mrb[0].mxu0
        %397 = vmatprep.mubr.f32.mxu0 0.0
        %398 = vmatmul.mubr.f32.gmra.mrb[0].mxu0 %v306
        %v399 = vpop.f32.mrb[0].mxu0
        %v400 = vadd.f32 0.0, %v399
        %v401 = vpop.f32.mrb[0].mxu0
        %402 = vdwg.mxu0
        %v403 = vmul.f32 %v375, %v375
        %v404 = vmul.f32 %v380, %v380
        %v405 = vmul.f32 %v385, %v385
        %v406 = vmul.f32 %v390, %v390
        %v407 = vmul.f32 %v395, %v395
        %v408 = vmul.f32 %v400, %v400
        %v409 = vlaneseq
        %v410 = vand.u32 %v409, 127
        %vm411 = vcmp.lt.s32.totalorder %v410, 64
        %v412 = vsel %vm411, %v403, %v406
        %v413 = vsel %vm411, %v404, %v407
        %v414 = vsel %vm411, %v405, %v408
        %v415 = vsel %vm411, %v406, %v403
        %v416 = vsel %vm411, %v407, %v404
        %v417 = vsel %vm411, %v408, %v405
        %418 = vrot.lane.b32.xlu0 %v415, 64
        %v419 = vpop.permute.xlu0 %418
        %420 = vrot.lane.b32.xlu0 %v416, 64
        %v421 = vpop.permute.xlu0 %420
        %422 = vrot.lane.b32.xlu0 %v417, 64
        %v423 = vpop.permute.xlu0 %422
        %v424 = vadd.f32 %v412, %v419
        %v425 = vadd.f32 %v413, %v421
        %v426 = vadd.f32 %v414, %v423
        %427 = vst [vmem:[%s242] sm:$0xff] %v424
        %428 = vst [vmem:[%s242 + $0x8] sm:$0xff] %v425
        %429 = vst [vmem:[%s242 + $0x10] sm:$0xff] %v426
        %v430 = vld [vmem:[#allocation2] sm:$0x1]
        %v431 = vadd.f32 %v403, %v404
        %v432 = vadd.f32 %v431, %v405
        %v433 = vrot.slane %v432, 4
        %v434 = vadd.f32 %v432, %v433
        %v435 = vrot.slane %v434, 2
        %v436 = vadd.f32 %v434, %v435
        %v437 = vrot.slane %v436, 1
        %v438 = vadd.f32 %v436, %v437
        %v439 = vadd.f32 %v430, %v438
        %440 = vst [vmem:[#allocation2] sm:$0x1] %v439
        %v441 = vld [vmem:[#allocation2 + $0x1] sm:$0x1]
        %v442 = vmul.f32 %v375, %v390
        %v443 = vmul.f32 %v380, %v395
        %v444 = vmul.f32 %v385, %v400
        %v445 = vadd.f32 %v442, %v443
        %v446 = vadd.f32 %v445, %v444
        %v447 = vrot.slane %v446, 4
        %v448 = vadd.f32 %v446, %v447
        %v449 = vrot.slane %v448, 2
        %v450 = vadd.f32 %v448, %v449
        %v451 = vrot.slane %v450, 1
        %v452 = vadd.f32 %v450, %v451
        %v453 = vadd.f32 %v441, %v452
        %454 = vst [vmem:[#allocation2 + $0x1] sm:$0x1] %v453
        %v455 = vld [vmem:[#allocation2 + $0x2] sm:$0x1]
        %v456 = vadd.f32 %v406, %v407
        %v457 = vadd.f32 %v456, %v408
        %v458 = vrot.slane %v457, 4
        %v459 = vadd.f32 %v457, %v458
        %v460 = vrot.slane %v459, 2
        %v461 = vadd.f32 %v459, %v460
        %v462 = vrot.slane %v461, 1
        %v463 = vadd.f32 %v461, %v462
        %v464 = vadd.f32 %v455, %v463
        %465 = vst [vmem:[#allocation2 + $0x2] sm:$0x1] %v464
        // Predicated region
        $region37: #{apc_snr_forward.1} parent=31 // pred_check
          %p466 = pneg %p274
        $region38: #{apc_snr_forward.1} parent=31 // pred_check_branch
          %468 = sbr.rel (%p466) target = $region40
        $region39: #{apc_snr_forward.1} parent=31 // pred_region
          %v469 = vld [vmem:[#allocation2] sm:$0xff]
          %470 = vst [vmem:[%s273] sm:$0xff] %v469
        $region40: #{apc_snr_forward.1} parent=31 // pred_fallthru
          _
        %s471 = sand.u32 %s118, 1
        %s472 = scalar_lea.sflag [#allocation4], %s471
        %s473 = sand.u32 %s118, 1
        %s474 = smul.addr %s473, 24
        %s475 = scalar_lea.vmem [#allocation3], %s474
        %p476 = scmp.lt.s32.totalorder %s23, 1
        %s477 = scalar_select %p476, %s23, 1
        %s478 = smul.addr %s477, 8
        %s479 = scalar_lea.vmem %s4, %s478
        // Predicated region
        $region41: #{apc_snr_forward.1} parent=31 // pred_check
          %p480 = pneg %p128
        $region42: #{apc_snr_forward.1} parent=31 // pred_check_branch
          %482 = sbr.rel (%p480) target = $region44
        $region43: #{apc_snr_forward.1} parent=31 // pred_region
          %s483 = smul.u32 3, %s24
          %s485 = ssub.s32 384, 384
          %486 = vsyncadd %s472, %s485
          %s487 = smul.addr %s23, 3
          %s488 = sadd.s32 %s483, %s487
          %s489 = smul.addr %s488, 128
          %s490 = scalar_lea.hbm %s3, %s489
          %s491 = sshll.u32 %s475, 4
          %s492 = int_to_ptr.vmem [resolvable:$true] %s491
          %497 = dma.vmem_to_hbm [thread:$0]  %s492, 384, %s490, %s472, 128, 128, 8
        $region44: #{apc_snr_forward.1} parent=31 // pred_fallthru
          _
        // Predicated region
        $region45: #{apc_snr_forward.1} parent=31 // pred_check
          %p498 = pneg %p154
        $region46: #{apc_snr_forward.1} parent=31 // pred_check_branch
          %500 = sbr.rel (%p498) target = $region48
        $region47: #{apc_snr_forward.1} parent=31 // pred_region
          _
        $region48: #{apc_snr_forward.1} parent=31 // pred_fallthru
          _
      $region32: #{apc_snr_forward.1} parent=5 // pred_fallthru
        _
      %p501 = scmp.le.s32.totalorder 2, %s14
      // Predicated region
      $region49: #{apc_snr_forward.1} parent=5 // pred_check
        %p502 = pneg %p501
      $region50: #{apc_snr_forward.1} parent=5 // pred_check_branch
        %504 = sbr.rel (%p502) target = $region52
      $region51: #{apc_snr_forward.1} parent=5 // pred_region
        %s505 = ssub.s32 %s14, 2
        // Predicated region
        $region53: #{apc_snr_forward.1} parent=51 // pred_check
          %p506 = pneg %p134
        $region54: #{apc_snr_forward.1} parent=51 // pred_check_branch
          %508 = sbr.rel (%p506) target = $region56
        $region55: #{apc_snr_forward.1} parent=51 // pred_region
          %s509 = sand.u32 %s119, 1
          %s510 = scalar_lea.sflag [#allocation4], %s509
          %s511 = sand.u32 %s119, 1
          %s512 = smul.addr %s511, 24
          %s513 = scalar_lea.vmem [#allocation3], %s512
          %514 = dma.done %s510, 384
        $region56: #{apc_snr_forward.1} parent=51 // pred_fallthru
          _
        // Predicated region
        $region57: #{apc_snr_forward.1} parent=51 // pred_check
          %p515 = pneg %p160
        $region58: #{apc_snr_forward.1} parent=51 // pred_check_branch
          %517 = sbr.rel (%p515) target = $region60
        $region59: #{apc_snr_forward.1} parent=51 // pred_region
          %p518 = scmp.lt.s32.totalorder %s25, 1
          %s519 = scalar_select %p518, %s25, 1
          %s520 = smul.addr %s519, 8
          %s521 = scalar_lea.vmem %s4, %s520
        $region60: #{apc_snr_forward.1} parent=51 // pred_fallthru
          _
      $region52: #{apc_snr_forward.1} parent=5 // pred_fallthru
        _
    $region6: #{apc_snr_forward.1} parent=1 // loop_footer
      %s18 = sadd.s32 1, %s14
    $region7: #{apc_snr_forward.1} parent=1 // loop_footer_branch
      %13 = sbr.rel target = $region3
    $region8: #{apc_snr_forward.1} parent=1 // loop_exit
      _
    %522 = vsyncpa [#allocation4], 1
    %s523 = scalar_lea.sflag [#allocation4], 1
    %524 = vsyncpa %s523, 1

</llo_original>
